<compile_context>
chip_gen: v7x
topology: tpu7x:2x2x1
jax: 0.10.0
libtpu: 0.0.40
codegen_flags: <defaults>
</compile_context>

<pallas_src>
import jax
import jax.numpy as jnp
from jax import lax
from jax.experimental import pallas as pl
from jax.experimental.pallas import tpu as pltpu

SCALE = 4.4892


def _matmul_where_kernel(w_ref, x_ref, o_ref):
    # w_ref: (Cout_pad, K)    stacked, flipped weight matrix (K = KH*KW*Cin)
    # x_ref: (K, Mblk)        stacked tap slices of one image (lane-dense M)
    # o_ref: (Cout_pad, Mblk) lane-dense, sublane-aligned output tile
    acc = jnp.dot(w_ref[...], x_ref[...], preferred_element_type=jnp.float32)
    o_ref[...] = jnp.where(acc > 0, acc, acc * SCALE)


def _default_m_splits():
    # Split the M (lane) axis across v7x's two TensorCores; on single-core
    # generations (v5e/v6e) extra grid steps are pure overhead, so keep 1.
    try:
        kind = jax.devices()[0].device_kind.lower()
        if "v7" in kind or "7x" in kind:
            return 2
    except Exception:
        pass
    return 1


def conv_transpose_where(x, w, stride=(2, 2), padding=(2, 0), m_splits=None):
    """x: (N, Cin, H, W), w: (Cin, Cout, KH, KW) -> (N, Cout, OH, OW) float32."""
    N, Cin, H, W = x.shape
    Cin_w, Cout, KH, KW = w.shape
    assert Cin == Cin_w
    sh, sw = stride
    ph, pw = padding
    Ph, Pw = KH - 1 - ph, KW - 1 - pw
    # TODO(synk): handle padding > kernel_size - 1 (would need input cropping).
    assert Ph >= 0 and Pw >= 0

    Hd, Wd = (H - 1) * sh + 1, (W - 1) * sw + 1          # dilated size
    Hp, Wp = Hd + 2 * Ph, Wd + 2 * Pw                    # padded-dilated size
    OH, OW = Hp - KH + 1, Wp - KW + 1                    # output size

    # "Wide" row-major storage so tap (kh, kw) == one contiguous flat slice.
    Hrows = max(Hp + 1, Ph + H * sh)                     # >= Hp+1 rows (tail zeros)
    Wrow = max(Wp, Pw + W * sw)                          # stored row width >= Wp
    L = Hrows * Wrow
    Mw = OH * Wrow                                       # wide M (lane axis)
    # Invariants keeping wrap-around garbage confined to cropped rows/columns.
    assert Wrow >= OW + KW - 1 and Hrows >= OH + KH - 1
    assert (KH - 1) * Wrow + (KW - 1) + Mw <= L

    if m_splits is None:
        m_splits = _default_m_splits()
    m_align = 128 * m_splits
    Mw_pad = ((Mw + m_align - 1) // m_align) * m_align   # lane-dense output width
    Mblk = Mw_pad // m_splits
    Cout_pad = ((Cout + 7) // 8) * 8                     # sublane-aligned rows
    K = KH * KW * Cin                                    # stacked contraction dim

    # Zero-dilate by stride via pad+reshape (fusible, no scatter), then border pad.
    xd = jnp.pad(x.reshape(N, Cin, H, 1, W, 1),
                 ((0, 0), (0, 0), (0, 0), (0, sh - 1), (0, 0), (0, sw - 1)))
    xd = xd.reshape(N, Cin, H * sh, W * sw)
    xp = jnp.pad(xd, ((0, 0), (0, 0),
                      (Ph, Hrows - Ph - H * sh), (Pw, Wrow - Pw - W * sw)))
    xflat = xp.reshape(N, Cin, L)

    # Stack the KH*KW shifted tap slices along the contraction axis so the
    # kernel performs a single K=KH*KW*Cin matmul (no per-tap MXU phases, no
    # unaligned in-kernel lane slices).
    taps = [lax.slice_in_dim(xflat, kh * Wrow + kw, kh * Wrow + kw + Mw, axis=2)
            for kh in range(KH) for kw in range(KW)]
    xstk = jnp.stack(taps, axis=1).reshape(N, K, Mw)     # (N, KH*KW*Cin, Mw)
    xstk = jnp.pad(xstk, ((0, 0), (0, 0), (0, Mw_pad - Mw)))

    # wmat[co, (kh*KW + kw)*Cin + ci] = w[ci, co, KH-1-kh, KW-1-kw]
    wmat = jnp.flip(w, (2, 3)).transpose(1, 2, 3, 0).reshape(Cout, K)
    wmat = jnp.pad(wmat, ((0, Cout_pad - Cout), (0, 0)))
    # NOTE: casting wmat/xstk to bf16 (keeping the f32 accumulator + f32 where)
    # is a further MXU/DMA win on v6e/v7x; kept f32 for exact module parity.

    cost = pl.CostEstimate(
        flops=2 * N * Cout_pad * K * Mw_pad,
        transcendentals=0,
        bytes_accessed=4 * (wmat.size + xstk.size + N * Cout_pad * Mw_pad),
    )

    out_wide = pl.pallas_call(
        _matmul_where_kernel,
        out_shape=jax.ShapeDtypeStruct((N, Cout_pad, Mw_pad), jnp.float32),
        grid=(N, m_splits),
        in_specs=[
            pl.BlockSpec((Cout_pad, K), lambda n, j: (0, 0)),       # full weight
            pl.BlockSpec((None, K, Mblk), lambda n, j: (n, 0, j)),  # image slab
        ],
        out_specs=pl.BlockSpec((None, Cout_pad, Mblk), lambda n, j: (n, 0, j)),
        compiler_params=pltpu.CompilerParams(
            dimension_semantics=("parallel", "parallel")),
        cost_estimate=cost,
    )(wmat, xstk)

    # Crop the Cout / M padding; (OH*Wrow) -> (OH, Wrow) is a free contiguous
    # reshape; then crop the Wrow-OW garbage columns.  Already NCHW: no transpose.
    return out_wide[:, :Cout, :Mw].reshape(N, Cout, OH, Wrow)[:, :, :, :OW]


if __name__ == "__main__":
    key = jax.random.PRNGKey(0)
    kx, kw_key = jax.random.split(key)
    # module's forward implies x: (1, 19, 12, 22); ConvTranspose2d weight: (19, 26, 3, 4)
    x = jax.random.normal(kx, (1, 19, 12, 22), dtype=jnp.float32)
    w = jax.random.normal(kw_key, (19, 26, 3, 4), dtype=jnp.float32) * 0.05

    y = jax.jit(conv_transpose_where)(x, w)
    y = jax.block_until_ready(y)
    assert y.shape == (1, 26, 21, 46), y.shape

    # Reference: same transposed-conv lowering via XLA's dilated conv + fused where.
    KH, KW, ph, pw, sh, sw = 3, 4, 2, 0, 2, 2
    Ph, Pw = KH - 1 - ph, KW - 1 - pw
    wflip = jnp.flip(w, (2, 3)).transpose(1, 0, 2, 3)            # (Cout, Cin, KH, KW)
    ref = lax.conv_general_dilated(
        x, wflip, window_strides=(1, 1), padding=[(Ph, Ph), (Pw, Pw)],
        lhs_dilation=(sh, sw), rhs_dilation=(1, 1),
        dimension_numbers=("NCHW", "OIHW", "NCHW"),
        precision=lax.Precision.HIGHEST)
    ref = jnp.where(ref > 0, ref, ref * SCALE)
    err = float(jnp.max(jnp.abs(y - ref)))
    assert err < 1e-3, err

    print("KERNEL_OK")
</pallas_src>

<mosaic_0001>
module attributes {stable_mosaic.version = 11 : i64} {
  func.func @_matmul_where_kernel(%arg0: i32, %arg1: i32, %arg2: memref<32x228xf32, #tpu.memory_space<vmem>>, %arg3: memref<1x228x1152xf32, #tpu.memory_space<vmem>>, %arg4: memref<1x32x1152xf32, #tpu.memory_space<vmem>>) attributes {dimension_semantics = [#tpu.dimension_semantics<parallel>, #tpu.dimension_semantics<parallel>], iteration_bounds = array<i64: 1, 1>, scalar_prefetch = 0 : i64, scratch_operands = 0 : i64, tpu.core_type = #tpu.core_type<tc>, window_params = [{pipeline_mode = #tpu.pipeline_mode<synchronous>, transform_indices = @transform_0, window_bounds = array<i64: 32, 228>}, {transform_indices = @transform_1, window_bounds = array<i64: 1, 228, 1152>}, {transform_indices = @transform_2, window_bounds = array<i64: 1, 32, 1152>}]} {
    %c0 = arith.constant 0 : index
    %c0_0 = arith.constant 0 : index
    %0 = vector.load %arg2[%c0, %c0_0] : memref<32x228xf32, #tpu.memory_space<vmem>>, vector<32x228xf32>
    %c0_1 = arith.constant 0 : index
    %c0_2 = arith.constant 0 : index
    %c0_3 = arith.constant 0 : index
    %1 = vector.load %arg3[%c0_1, %c0_2, %c0_3] : memref<1x228x1152xf32, #tpu.memory_space<vmem>>, vector<1x228x1152xf32>
    %2 = vector.shape_cast %1 : vector<1x228x1152xf32> to vector<228x1152xf32>
    %cst = arith.constant dense<0.000000e+00> : vector<32x1152xf32>
    %3 = tpu.matmul %0, %2, %cst {dimension_numbers = #tpu.dot_dimension_numbers<[1], [0], [0], [1], [0, 0, 1, 1], [], []>} : vector<32x228xf32>, vector<228x1152xf32>, vector<32x1152xf32> -> vector<32x1152xf32>
    %cst_4 = arith.constant 0.000000e+00 : f32
    %4 = vector.broadcast %cst_4 : f32 to vector<32x1152xf32>
    %5 = arith.cmpf ogt, %3, %4 : vector<32x1152xf32>
    %cst_5 = arith.constant 4.489200e+00 : f32
    %6 = vector.broadcast %cst_5 : f32 to vector<32x1152xf32>
    %7 = arith.mulf %3, %6 : vector<32x1152xf32>
    %8 = arith.select %5, %3, %7 : vector<32x1152xi1>, vector<32x1152xf32>
    %c0_6 = arith.constant 0 : index
    %c0_7 = arith.constant 0 : index
    %c0_8 = arith.constant 0 : index
    %9 = vector.load %arg4[%c0_6, %c0_7, %c0_8] : memref<1x32x1152xf32, #tpu.memory_space<vmem>>, vector<1x32x1152xf32>
    %10 = vector.shape_cast %9 : vector<1x32x1152xf32> to vector<32x1152xf32>
    %11 = vector.shape_cast %8 : vector<32x1152xf32> to vector<1x32x1152xf32>
    tpu.vector_store %arg4[%c0_6, %c0_7, %c0_8], %11 {strides = array<i32>} : memref<1x32x1152xf32, #tpu.memory_space<vmem>>, vector<1x32x1152xf32>,
    return
  }
  func.func @transform_0(%arg0: i32, %arg1: i32) -> (i32, i32) {
    %c0_i32 = arith.constant 0 : i32
    %c0_i32_0 = arith.constant 0 : i32
    %c0_i32_1 = arith.constant 0 : i32
    return %c0_i32, %c0_i32_0 : i32, i32
  }
  func.func @transform_1(%arg0: i32, %arg1: i32) -> (i32, i32, i32) {
    %c0_i32 = arith.constant 0 : i32
    %c0_i32_0 = arith.constant 0 : i32
    return %arg0, %c0_i32, %arg1 : i32, i32, i32
  }
  func.func @transform_2(%arg0: i32, %arg1: i32) -> (i32, i32, i32) {
    %c0_i32 = arith.constant 0 : i32
    %c0_i32_0 = arith.constant 0 : i32
    return %arg0, %c0_i32, %arg1 : i32, i32, i32
  }
}

</mosaic_0001>

<llo_original>
// kernel: conv_transpose_where.1
$region0: #{conv_transpose_where.1}
  #allocation0 [shape = 'u32[]', space=smem, size = 0x4, offset = 0x4, fixed_abs, tag = 'smem constant byte address 0x4 - core index']
  #allocation1 [shape = 'u32[144,128]{1,0:T(1,128)}', space=vmem, size = 0x12000, scoped, tag = 'internal scratch']
  %s0 = inlined_call_operand.vmem [shape: f32[32,228], index: 0, kind: input, shape index: {}]
  %s1 = inlined_call_operand.vmem [shape: f32[1,228,1152], index: 1, kind: input, shape index: {}]
  %s2 = inlined_call_operand.vmem [shape: f32[1,32,1152], index: 2, kind: output, shape index: {}]
  %s3 = sld [smem:[#allocation0]]
  $region18: #{conv_transpose_where.1} parent=0
    _
  %s5 = ssub.s32 1, %s3
  %s6 = scalar_select 0, %s5, %s3
  // Predicated region
  $region2: #{conv_transpose_where.1} parent=0 // pred_check
    _
  $region3: #{conv_transpose_where.1} parent=0 // pred_check_branch
    %8 = sbr.rel (0) target = $region5
  $region4: #{conv_transpose_where.1} parent=0 // pred_region
    _
  $region5: #{conv_transpose_where.1} parent=0 // pred_fallthru
    _
  // Predicated region
  $region6: #{conv_transpose_where.1} parent=0 // pred_check
    _
  $region7: #{conv_transpose_where.1} parent=0 // pred_check_branch
    %10 = sbr.rel (0) target = $region9
  $region8: #{conv_transpose_where.1} parent=0 // pred_region
    _
  $region9: #{conv_transpose_where.1} parent=0 // pred_fallthru
    _
  %v11 = vld [vmem:[%s0] sm:$0xff]
  %v12 = vld [vmem:[%s0 + $0x8] sm:$0xff]
  %v13 = vld [vmem:[%s0 + $0x10] sm:$0xff]
  %v14 = vld [vmem:[%s0 + $0x18] sm:$0xff]
  %v15 = vld [vmem:[%s0 + $0x20] sm:$0xff]
  %v16 = vld [vmem:[%s0 + $0x28] sm:$0xff]
  %v17 = vld [vmem:[%s0 + $0x30] sm:$0xff]
  %v18 = vld [vmem:[%s0 + $0x38] sm:$0xff]
  %v19 = vld [vmem:[%s1] sm:$0xff]
  %v20 = vld [vmem:[%s1 + $0x8] sm:$0xff]
  %v21 = vld [vmem:[%s1 + $0x10] sm:$0xff]
  %v22 = vld [vmem:[%s1 + $0x18] sm:$0xff]
  %v23 = vld [vmem:[%s1 + $0x20] sm:$0xff]
  %v24 = vld [vmem:[%s1 + $0x28] sm:$0xff]
  %v25 = vld [vmem:[%s1 + $0x30] sm:$0xff]
  %v26 = vld [vmem:[%s1 + $0x38] sm:$0xff]
  %v27 = vld [vmem:[%s1 + $0x40] sm:$0xff]
  %v28 = vld [vmem:[%s1 + $0x48] sm:$0xff]
  %v29 = vld [vmem:[%s1 + $0x50] sm:$0xff]
  %v30 = vld [vmem:[%s1 + $0x58] sm:$0xff]
  %v31 = vld [vmem:[%s1 + $0x60] sm:$0xff]
  %v32 = vld [vmem:[%s1 + $0x68] sm:$0xff]
  %v33 = vld [vmem:[%s1 + $0x70] sm:$0xff]
  %v34 = vld [vmem:[%s1 + $0x78] sm:$0xff]
  %v35 = vld [vmem:[%s1 + $0x80] sm:$0xff]
  %v36 = vld [vmem:[%s1 + $0x88] sm:$0xff]
  %v37 = vld [vmem:[%s1 + $0x90] sm:$0xff]
  %v38 = vld [vmem:[%s1 + $0x98] sm:$0xff]
  %v39 = vld [vmem:[%s1 + $0xa0] sm:$0xff]
  %v40 = vld [vmem:[%s1 + $0xa8] sm:$0xff]
  %v41 = vld [vmem:[%s1 + $0xb0] sm:$0xff]
  %v42 = vld [vmem:[%s1 + $0xb8] sm:$0xff]
  %v43 = vld [vmem:[%s1 + $0xc0] sm:$0xff]
  %v44 = vld [vmem:[%s1 + $0xc8] sm:$0xff]
  %v45 = vld [vmem:[%s1 + $0xd0] sm:$0xff]
  %v46 = vld [vmem:[%s1 + $0xd8] sm:$0xff]
  %v47 = vld [vmem:[%s1 + $0xe0] sm:$0xff]
  %v48 = vld [vmem:[%s1 + $0xe8] sm:$0xff]
  %v49 = vld [vmem:[%s1 + $0xf0] sm:$0xff]
  %v50 = vld [vmem:[%s1 + $0xf8] sm:$0xff]
  %v51 = vld [vmem:[%s1 + $0x100] sm:$0xff]
  %v52 = vld [vmem:[%s1 + $0x108] sm:$0xff]
  %v53 = vld [vmem:[%s1 + $0x110] sm:$0xff]
  %v54 = vld [vmem:[%s1 + $0x118] sm:$0xff]
  %v55 = vld [vmem:[%s1 + $0x120] sm:$0xff]
  %v56 = vld [vmem:[%s1 + $0x128] sm:$0xff]
  %v57 = vld [vmem:[%s1 + $0x130] sm:$0xff]
  %v58 = vld [vmem:[%s1 + $0x138] sm:$0xff]
  %v59 = vld [vmem:[%s1 + $0x140] sm:$0xff]
  %v60 = vld [vmem:[%s1 + $0x148] sm:$0xff]
  %v61 = vld [vmem:[%s1 + $0x150] sm:$0xff]
  %v62 = vld [vmem:[%s1 + $0x158] sm:$0xff]
  %v63 = vld [vmem:[%s1 + $0x160] sm:$0xff]
  %v64 = vld [vmem:[%s1 + $0x168] sm:$0xff]
  %v65 = vld [vmem:[%s1 + $0x170] sm:$0xff]
  %v66 = vld [vmem:[%s1 + $0x178] sm:$0xff]
  %v67 = vld [vmem:[%s1 + $0x180] sm:$0xff]
  %v68 = vld [vmem:[%s1 + $0x188] sm:$0xff]
  %v69 = vld [vmem:[%s1 + $0x190] sm:$0xff]
  %v70 = vld [vmem:[%s1 + $0x198] sm:$0xff]
  %v71 = vld [vmem:[%s1 + $0x1a0] sm:$0xff]
  %v72 = vld [vmem:[%s1 + $0x1a8] sm:$0xff]
  %v73 = vld [vmem:[%s1 + $0x1b0] sm:$0xff]
  %v74 = vld [vmem:[%s1 + $0x1b8] sm:$0xff]
  %v75 = vld [vmem:[%s1 + $0x1c0] sm:$0xff]
  %v76 = vld [vmem:[%s1 + $0x1c8] sm:$0xff]
  %v77 = vld [vmem:[%s1 + $0x1d0] sm:$0xff]
  %v78 = vld [vmem:[%s1 + $0x1d8] sm:$0xff]
  %v79 = vld [vmem:[%s1 + $0x1e0] sm:$0xff]
  %v80 = vld [vmem:[%s1 + $0x1e8] sm:$0xff]
  %v81 = vld [vmem:[%s1 + $0x1f0] sm:$0xff]
  %v82 = vld [vmem:[%s1 + $0x1f8] sm:$0xff]
  %v83 = vld [vmem:[%s1 + $0x200] sm:$0xff]
  %v84 = vld [vmem:[%s1 + $0x208] sm:$0xff]
  %v85 = vld [vmem:[%s1 + $0x210] sm:$0xff]
  %v86 = vld [vmem:[%s1 + $0x218] sm:$0xff]
  %v87 = vld [vmem:[%s1 + $0x220] sm:$0xff]
  %v88 = vld [vmem:[%s1 + $0x228] sm:$0xff]
  %v89 = vld [vmem:[%s1 + $0x230] sm:$0xff]
  %v90 = vld [vmem:[%s1 + $0x238] sm:$0xff]
  %v91 = vld [vmem:[%s1 + $0x240] sm:$0xff]
  %v92 = vld [vmem:[%s1 + $0x248] sm:$0xff]
  %v93 = vld [vmem:[%s1 + $0x250] sm:$0xff]
  %v94 = vld [vmem:[%s1 + $0x258] sm:$0xff]
  %v95 = vld [vmem:[%s1 + $0x260] sm:$0xff]
  %v96 = vld [vmem:[%s1 + $0x268] sm:$0xff]
  %v97 = vld [vmem:[%s1 + $0x270] sm:$0xff]
  %v98 = vld [vmem:[%s1 + $0x278] sm:$0xff]
  %v99 = vld [vmem:[%s1 + $0x280] sm:$0xff]
  %v100 = vld [vmem:[%s1 + $0x288] sm:$0xff]
  %v101 = vld [vmem:[%s1 + $0x290] sm:$0xff]
  %v102 = vld [vmem:[%s1 + $0x298] sm:$0xff]
  %v103 = vld [vmem:[%s1 + $0x2a0] sm:$0xff]
  %v104 = vld [vmem:[%s1 + $0x2a8] sm:$0xff]
  %v105 = vld [vmem:[%s1 + $0x2b0] sm:$0xff]
  %v106 = vld [vmem:[%s1 + $0x2b8] sm:$0xff]
  %v107 = vld [vmem:[%s1 + $0x2c0] sm:$0xff]
  %v108 = vld [vmem:[%s1 + $0x2c8] sm:$0xff]
  %v109 = vld [vmem:[%s1 + $0x2d0] sm:$0xff]
  %v110 = vld [vmem:[%s1 + $0x2d8] sm:$0xff]
  %v111 = vld [vmem:[%s1 + $0x2e0] sm:$0xff]
  %v112 = vld [vmem:[%s1 + $0x2e8] sm:$0xff]
  %v113 = vld [vmem:[%s1 + $0x2f0] sm:$0xff]
  %v114 = vld [vmem:[%s1 + $0x2f8] sm:$0xff]
  %v115 = vld [vmem:[%s1 + $0x300] sm:$0xff]
  %v116 = vld [vmem:[%s1 + $0x308] sm:$0xff]
  %v117 = vld [vmem:[%s1 + $0x310] sm:$0xff]
  %v118 = vld [vmem:[%s1 + $0x318] sm:$0xff]
  %v119 = vld [vmem:[%s1 + $0x320] sm:$0xff]
  %v120 = vld [vmem:[%s1 + $0x328] sm:$0xff]
  %v121 = vld [vmem:[%s1 + $0x330] sm:$0xff]
  %v122 = vld [vmem:[%s1 + $0x338] sm:$0xff]
  %v123 = vld [vmem:[%s1 + $0x340] sm:$0xff]
  %v124 = vld [vmem:[%s1 + $0x348] sm:$0xff]
  %v125 = vld [vmem:[%s1 + $0x350] sm:$0xff]
  %v126 = vld [vmem:[%s1 + $0x358] sm:$0xff]
  %v127 = vld [vmem:[%s1 + $0x360] sm:$0xff]
  %v128 = vld [vmem:[%s1 + $0x368] sm:$0xff]
  %v129 = vld [vmem:[%s1 + $0x370] sm:$0xff]
  %v130 = vld [vmem:[%s1 + $0x378] sm:$0xff]
  %v131 = vld [vmem:[%s1 + $0x380] sm:$0xff]
  %v132 = vld [vmem:[%s1 + $0x388] sm:$0xff]
  %v133 = vld [vmem:[%s1 + $0x390] sm:$0xff]
  %v134 = vld [vmem:[%s1 + $0x398] sm:$0xff]
  %v135 = vld [vmem:[%s1 + $0x3a0] sm:$0xff]
  %v136 = vld [vmem:[%s1 + $0x3a8] sm:$0xff]
  %v137 = vld [vmem:[%s1 + $0x3b0] sm:$0xff]
  %v138 = vld [vmem:[%s1 + $0x3b8] sm:$0xff]
  %v139 = vld [vmem:[%s1 + $0x3c0] sm:$0xff]
  %v140 = vld [vmem:[%s1 + $0x3c8] sm:$0xff]
  %v141 = vld [vmem:[%s1 + $0x3d0] sm:$0xff]
  %v142 = vld [vmem:[%s1 + $0x3d8] sm:$0xff]
  %v143 = vld [vmem:[%s1 + $0x3e0] sm:$0xff]
  %v144 = vld [vmem:[%s1 + $0x3e8] sm:$0xff]
  %v145 = vld [vmem:[%s1 + $0x3f0] sm:$0xff]
  %v146 = vld [vmem:[%s1 + $0x3f8] sm:$0xff]
  %v147 = vld [vmem:[%s1 + $0x400] sm:$0xff]
  %v148 = vld [vmem:[%s1 + $0x408] sm:$0xff]
  %v149 = vld [vmem:[%s1 + $0x410] sm:$0xff]
  %v150 = vld [vmem:[%s1 + $0x418] sm:$0xff]
  %v151 = vld [vmem:[%s1 + $0x420] sm:$0xff]
  %v152 = vld [vmem:[%s1 + $0x428] sm:$0xff]
  %v153 = vld [vmem:[%s1 + $0x430] sm:$0xff]
  %v154 = vld [vmem:[%s1 + $0x438] sm:$0xff]
  %v155 = vld [vmem:[%s1 + $0x440] sm:$0xff]
  %v156 = vld [vmem:[%s1 + $0x448] sm:$0xff]
  %v157 = vld [vmem:[%s1 + $0x450] sm:$0xff]
  %v158 = vld [vmem:[%s1 + $0x458] sm:$0xff]
  %v159 = vld [vmem:[%s1 + $0x460] sm:$0xff]
  %v160 = vld [vmem:[%s1 + $0x468] sm:$0xff]
  %v161 = vld [vmem:[%s1 + $0x470] sm:$0xff]
  %v162 = vld [vmem:[%s1 + $0x478] sm:$0xff]
  %v163 = vld [vmem:[%s1 + $0x480] sm:$0xff]
  %v164 = vld [vmem:[%s1 + $0x488] sm:$0xff]
  %v165 = vld [vmem:[%s1 + $0x490] sm:$0xff]
  %v166 = vld [vmem:[%s1 + $0x498] sm:$0xff]
  %v167 = vld [vmem:[%s1 + $0x4a0] sm:$0xff]
  %v168 = vld [vmem:[%s1 + $0x4a8] sm:$0xff]
  %v169 = vld [vmem:[%s1 + $0x4b0] sm:$0xff]
  %v170 = vld [vmem:[%s1 + $0x4b8] sm:$0xff]
  %v171 = vld [vmem:[%s1 + $0x4c0] sm:$0xff]
  %v172 = vld [vmem:[%s1 + $0x4c8] sm:$0xff]
  %v173 = vld [vmem:[%s1 + $0x4d0] sm:$0xff]
  %v174 = vld [vmem:[%s1 + $0x4d8] sm:$0xff]
  %v175 = vld [vmem:[%s1 + $0x4e0] sm:$0xff]
  %v176 = vld [vmem:[%s1 + $0x4e8] sm:$0xff]
  %v177 = vld [vmem:[%s1 + $0x4f0] sm:$0xff]
  %v178 = vld [vmem:[%s1 + $0x4f8] sm:$0xff]
  %v179 = vld [vmem:[%s1 + $0x500] sm:$0xff]
  %v180 = vld [vmem:[%s1 + $0x508] sm:$0xff]
  %v181 = vld [vmem:[%s1 + $0x510] sm:$0xff]
  %v182 = vld [vmem:[%s1 + $0x518] sm:$0xff]
  %v183 = vld [vmem:[%s1 + $0x520] sm:$0xff]
  %v184 = vld [vmem:[%s1 + $0x528] sm:$0xff]
  %v185 = vld [vmem:[%s1 + $0x530] sm:$0xff]
  %v186 = vld [vmem:[%s1 + $0x538] sm:$0xff]
  %v187 = vld [vmem:[%s1 + $0x540] sm:$0xff]
  %v188 = vld [vmem:[%s1 + $0x548] sm:$0xff]
  %v189 = vld [vmem:[%s1 + $0x550] sm:$0xff]
  %v190 = vld [vmem:[%s1 + $0x558] sm:$0xff]
  %v191 = vld [vmem:[%s1 + $0x560] sm:$0xff]
  %v192 = vld [vmem:[%s1 + $0x568] sm:$0xff]
  %v193 = vld [vmem:[%s1 + $0x570] sm:$0xff]
  %v194 = vld [vmem:[%s1 + $0x578] sm:$0xff]
  %v195 = vld [vmem:[%s1 + $0x580] sm:$0xff]
  %v196 = vld [vmem:[%s1 + $0x588] sm:$0xff]
  %v197 = vld [vmem:[%s1 + $0x590] sm:$0xff]
  %v198 = vld [vmem:[%s1 + $0x598] sm:$0xff]
  %v199 = vld [vmem:[%s1 + $0x5a0] sm:$0xff]
  %v200 = vld [vmem:[%s1 + $0x5a8] sm:$0xff]
  %v201 = vld [vmem:[%s1 + $0x5b0] sm:$0xff]
  %v202 = vld [vmem:[%s1 + $0x5b8] sm:$0xff]
  %v203 = vld [vmem:[%s1 + $0x5c0] sm:$0xff]
  %v204 = vld [vmem:[%s1 + $0x5c8] sm:$0xff]
  %v205 = vld [vmem:[%s1 + $0x5d0] sm:$0xff]
  %v206 = vld [vmem:[%s1 + $0x5d8] sm:$0xff]
  %v207 = vld [vmem:[%s1 + $0x5e0] sm:$0xff]
  %v208 = vld [vmem:[%s1 + $0x5e8] sm:$0xff]
  %v209 = vld [vmem:[%s1 + $0x5f0] sm:$0xff]
  %v210 = vld [vmem:[%s1 + $0x5f8] sm:$0xff]
  %v211 = vld [vmem:[%s1 + $0x600] sm:$0xff]
  %v212 = vld [vmem:[%s1 + $0x608] sm:$0xff]
  %v213 = vld [vmem:[%s1 + $0x610] sm:$0xff]
  %v214 = vld [vmem:[%s1 + $0x618] sm:$0xff]
  %v215 = vld [vmem:[%s1 + $0x620] sm:$0xff]
  %v216 = vld [vmem:[%s1 + $0x628] sm:$0xff]
  %v217 = vld [vmem:[%s1 + $0x630] sm:$0xff]
  %v218 = vld [vmem:[%s1 + $0x638] sm:$0xff]
  %v219 = vld [vmem:[%s1 + $0x640] sm:$0xff]
  %v220 = vld [vmem:[%s1 + $0x648] sm:$0xff]
  %v221 = vld [vmem:[%s1 + $0x650] sm:$0xff]
  %v222 = vld [vmem:[%s1 + $0x658] sm:$0xff]
  %v223 = vld [vmem:[%s1 + $0x660] sm:$0xff]
  %v224 = vld [vmem:[%s1 + $0x668] sm:$0xff]
  %v225 = vld [vmem:[%s1 + $0x670] sm:$0xff]
  %v226 = vld [vmem:[%s1 + $0x678] sm:$0xff]
  %v227 = vld [vmem:[%s1 + $0x680] sm:$0xff]
  %v228 = vld [vmem:[%s1 + $0x688] sm:$0xff]
  %v229 = vld [vmem:[%s1 + $0x690] sm:$0xff]
  %v230 = vld [vmem:[%s1 + $0x698] sm:$0xff]
  %v231 = vld [vmem:[%s1 + $0x6a0] sm:$0xff]
  %v232 = vld [vmem:[%s1 + $0x6a8] sm:$0xff]
  %v233 = vld [vmem:[%s1 + $0x6b0] sm:$0xff]
  %v234 = vld [vmem:[%s1 + $0x6b8] sm:$0xff]
  %v235 = vld [vmem:[%s1 + $0x6c0] sm:$0xff]
  %v236 = vld [vmem:[%s1 + $0x6c8] sm:$0xff]
  %v237 = vld [vmem:[%s1 + $0x6d0] sm:$0xff]
  %v238 = vld [vmem:[%s1 + $0x6d8] sm:$0xff]
  %v239 = vld [vmem:[%s1 + $0x6e0] sm:$0xff]
  %v240 = vld [vmem:[%s1 + $0x6e8] sm:$0xff]
  %v241 = vld [vmem:[%s1 + $0x6f0] sm:$0xff]
  %v242 = vld [vmem:[%s1 + $0x6f8] sm:$0xff]
  %v243 = vld [vmem:[%s1 + $0x700] sm:$0xff]
  %v244 = vld [vmem:[%s1 + $0x708] sm:$0xff]
  %v245 = vld [vmem:[%s1 + $0x710] sm:$0xff]
  %v246 = vld [vmem:[%s1 + $0x718] sm:$0xff]
  %v247 = vld [vmem:[%s1 + $0x720] sm:$0xff]
  %v248 = vld [vmem:[%s1 + $0x728] sm:$0xff]
  %v249 = vld [vmem:[%s1 + $0x730] sm:$0xff]
  %v250 = vld [vmem:[%s1 + $0x738] sm:$0xff]
  %v251 = vld [vmem:[%s1 + $0x740] sm:$0xff]
  %v252 = vld [vmem:[%s1 + $0x748] sm:$0xff]
  %v253 = vld [vmem:[%s1 + $0x750] sm:$0xff]
  %v254 = vld [vmem:[%s1 + $0x758] sm:$0xff]
  %v255 = vld [vmem:[%s1 + $0x760] sm:$0xff]
  %v256 = vld [vmem:[%s1 + $0x768] sm:$0xff]
  %v257 = vld [vmem:[%s1 + $0x770] sm:$0xff]
  %v258 = vld [vmem:[%s1 + $0x778] sm:$0xff]
  %v259 = vld [vmem:[%s1 + $0x780] sm:$0xff]
  %v260 = vld [vmem:[%s1 + $0x788] sm:$0xff]
  %v261 = vld [vmem:[%s1 + $0x790] sm:$0xff]
  %v262 = vld [vmem:[%s1 + $0x798] sm:$0xff]
  %v263 = vld [vmem:[%s1 + $0x7a0] sm:$0xff]
  %v264 = vld [vmem:[%s1 + $0x7a8] sm:$0xff]
  %v265 = vld [vmem:[%s1 + $0x7b0] sm:$0xff]
  %v266 = vld [vmem:[%s1 + $0x7b8] sm:$0xff]
  %v267 = vld [vmem:[%s1 + $0x7c0] sm:$0xff]
  %v268 = vld [vmem:[%s1 + $0x7c8] sm:$0xff]
  %v269 = vld [vmem:[%s1 + $0x7d0] sm:$0xff]
  %v270 = vld [vmem:[%s1 + $0x7d8] sm:$0xff]
  %v271 = vld [vmem:[%s1 + $0x7e0] sm:$0xf]
  %v272 = vld [vmem:[%s1 + $0x7e8] sm:$0xf]
  %v273 = vld [vmem:[%s1 + $0x7f0] sm:$0xf]
  %v274 = vld [vmem:[%s1 + $0x7f8] sm:$0xf]
  %v275 = vld [vmem:[%s1 + $0x800] sm:$0xf]
  %v276 = vld [vmem:[%s1 + $0x808] sm:$0xf]
  %v277 = vld [vmem:[%s1 + $0x810] sm:$0xf]
  %v278 = vld [vmem:[%s1 + $0x818] sm:$0xf]
  %v279 = vld [vmem:[%s1 + $0x820] sm:$0xf]
  %vm280 = vcmask 818176
  %v282 = vsel %vm280, %v12, 0
  %v285 = vsel %vm280, %v14, 0
  %v288 = vsel %vm280, %v16, 0
  %v291 = vsel %vm280, %v18, 0
  %vm293 = vcmask 1043456
  %v295 = vsel %vm293, %v271, 0
  %v298 = vsel %vm293, %v272, 0
  %v301 = vsel %vm293, %v273, 0
  %v304 = vsel %vm293, %v274, 0
  %v307 = vsel %vm293, %v275, 0
  %v310 = vsel %vm293, %v276, 0
  %v313 = vsel %vm293, %v277, 0
  %v316 = vsel %vm293, %v278, 0
  %v319 = vsel %vm293, %v279, 0
  %321 = vmatprep.subr.mxu0 %v20
  %322 = vmatpush1.msra.mxu0 %v19
  %323 = vmatprep.subr.mxu0 %v29
  %324 = vmatpush1.msra.mxu0 %v28
  %325 = vmatprep.subr.mxu0 %v38
  %326 = vmatpush1.msra.mxu0 %v37
  %327 = vmatprep.subr.mxu0 %v47
  %328 = vmatpush1.msra.mxu0 %v46
  %329 = vmatprep.subr.mxu0 %v56
  %330 = vmatpush1.msra.mxu0 %v55
  %331 = vmatprep.subr.mxu0 %v65
  %332 = vmatpush1.msra.mxu0 %v64
  %333 = vmatprep.subr.mxu0 %v74
  %334 = vmatpush1.msra.mxu0 %v73
  %335 = vmatprep.subr.mxu0 %v83
  %336 = vmatpush1.msra.mxu0 %v82
  %337 = vmatprep.subr.mxu0 %v92
  %338 = vmatpush1.msra.mxu0 %v91
  %339 = vmatprep.subr.mxu0 %v101
  %340 = vmatpush1.msra.mxu0 %v100
  %341 = vmatprep.subr.mxu0 %v110
  %342 = vmatpush1.msra.mxu0 %v109
  %343 = vmatprep.subr.mxu0 %v119
  %344 = vmatpush1.msra.mxu0 %v118
  %345 = vmatprep.subr.mxu0 %v128
  %346 = vmatpush1.msra.mxu0 %v127
  %347 = vmatprep.subr.mxu0 %v137
  %348 = vmatpush1.msra.mxu0 %v136
  %349 = vmatprep.subr.mxu0 %v146
  %350 = vmatpush1.msra.mxu0 %v145
  %351 = vmatprep.subr.mxu0 %v155
  %352 = vmatpush1.msra.mxu0 %v154
  %353 = vmatprep.subr.mxu0 %v164
  %354 = vmatpush1.msra.mxu0 %v163
  %355 = vmatprep.subr.mxu0 %v173
  %356 = vmatpush1.msra.mxu0 %v172
  %357 = vmatprep.subr.mxu0 %v182
  %358 = vmatpush1.msra.mxu0 %v181
  %359 = vmatprep.subr.mxu0 %v191
  %360 = vmatpush1.msra.mxu0 %v190
  %361 = vmatprep.subr.mxu0 %v200
  %362 = vmatpush1.msra.mxu0 %v199
  %363 = vmatprep.subr.mxu0 %v209
  %364 = vmatpush1.msra.mxu0 %v208
  %365 = vmatprep.subr.mxu0 %v218
  %366 = vmatpush1.msra.mxu0 %v217
  %367 = vmatprep.subr.mxu0 %v227
  %368 = vmatpush1.msra.mxu0 %v226
  %369 = vmatprep.subr.mxu0 %v236
  %370 = vmatpush1.msra.mxu0 %v235
  %371 = vmatprep.subr.mxu0 %v245
  %372 = vmatpush1.msra.mxu0 %v244
  %373 = vmatprep.subr.mxu0 %v254
  %374 = vmatpush1.msra.mxu0 %v253
  %375 = vmatprep.subr.mxu0 %v263
  %376 = vmatpush1.msra.mxu0 %v262
  %377 = vmatprep.subr.mxu0 %v298
  %378 = vmatpush1.msra.mxu0 %v295
  %379 = vmatprep.subr.mxu0 0.0
  %380 = vmatpush1.msra.mxu0 0.0
  %381 = vmatprep.subr.mxu0 0.0
  %382 = vmatpush1.msra.mxu0 0.0
  %383 = vmatprep.subr.mxu0 0.0
  %384 = vmatpush1.msra.mxu0 0.0
  %385 = vmatprep.mubr.f32.mxu0 %v282
  %386 = vmatmul.mubr.f32.gmra.mrb[0].mxu0 %v11
  %v387 = vpop.f32.mrb[0].mxu0
  %v388 = vadd.f32 0.0, %v387
  %v389 = vpop.f32.mrb[0].mxu0
  %v390 = vadd.f32 0.0, %v389
  %391 = vmatprep.mubr.f32.mxu0 %v285
  %392 = vmatmul.mubr.f32.gmra.mrb[0].mxu0 %v13
  %v393 = vpop.f32.mrb[0].mxu0
  %v394 = vadd.f32 0.0, %v393
  %v395 = vpop.f32.mrb[0].mxu0
  %v396 = vadd.f32 0.0, %v395
  %397 = vmatprep.mubr.f32.mxu0 %v288
  %398 = vmatmul.mubr.f32.gmra.mrb[0].mxu0 %v15
  %v399 = vpop.f32.mrb[0].mxu0
  %v400 = vadd.f32 0.0, %v399
  %v401 = vpop.f32.mrb[0].mxu0
  %v402 = vadd.f32 0.0, %v401
  %403 = vmatprep.mubr.f32.mxu0 %v291
  %404 = vmatmul.mubr.f32.gmra.mrb[0].mxu0 %v17
  %v405 = vpop.f32.mrb[0].mxu0
  %v406 = vadd.f32 0.0, %v405
  %v407 = vpop.f32.mrb[0].mxu0
  %v408 = vadd.f32 0.0, %v407
  %409 = vdwg.mxu0
  %410 = vmatprep.subr.mxu0 %v22
  %411 = vmatpush1.msra.mxu0 %v21
  %412 = vmatprep.subr.mxu0 %v31
  %413 = vmatpush1.msra.mxu0 %v30
  %414 = vmatprep.subr.mxu0 %v40
  %415 = vmatpush1.msra.mxu0 %v39
  %416 = vmatprep.subr.mxu0 %v49
  %417 = vmatpush1.msra.mxu0 %v48
  %418 = vmatprep.subr.mxu0 %v58
  %419 = vmatpush1.msra.mxu0 %v57
  %420 = vmatprep.subr.mxu0 %v67
  %421 = vmatpush1.msra.mxu0 %v66
  %422 = vmatprep.subr.mxu0 %v76
  %423 = vmatpush1.msra.mxu0 %v75
  %424 = vmatprep.subr.mxu0 %v85
  %425 = vmatpush1.msra.mxu0 %v84
  %426 = vmatprep.subr.mxu0 %v94
  %427 = vmatpush1.msra.mxu0 %v93
  %428 = vmatprep.subr.mxu0 %v103
  %429 = vmatpush1.msra.mxu0 %v102
  %430 = vmatprep.subr.mxu0 %v112
  %431 = vmatpush1.msra.mxu0 %v111
  %432 = vmatprep.subr.mxu0 %v121
  %433 = vmatpush1.msra.mxu0 %v120
  %434 = vmatprep.subr.mxu0 %v130
  %435 = vmatpush1.msra.mxu0 %v129
  %436 = vmatprep.subr.mxu0 %v139
  %437 = vmatpush1.msra.mxu0 %v138
  %438 = vmatprep.subr.mxu0 %v148
  %439 = vmatpush1.msra.mxu0 %v147
  %440 = vmatprep.subr.mxu0 %v157
  %441 = vmatpush1.msra.mxu0 %v156
  %442 = vmatprep.subr.mxu0 %v166
  %443 = vmatpush1.msra.mxu0 %v165
  %444 = vmatprep.subr.mxu0 %v175
  %445 = vmatpush1.msra.mxu0 %v174
  %446 = vmatprep.subr.mxu0 %v184
  %447 = vmatpush1.msra.mxu0 %v183
  %448 = vmatprep.subr.mxu0 %v193
  %449 = vmatpush1.msra.mxu0 %v192
  %450 = vmatprep.subr.mxu0 %v202
  %451 = vmatpush1.msra.mxu0 %v201
  %452 = vmatprep.subr.mxu0 %v211
  %453 = vmatpush1.msra.mxu0 %v210
  %454 = vmatprep.subr.mxu0 %v220
  %455 = vmatpush1.msra.mxu0 %v219
  %456 = vmatprep.subr.mxu0 %v229
  %457 = vmatpush1.msra.mxu0 %v228
  %458 = vmatprep.subr.mxu0 %v238
  %459 = vmatpush1.msra.mxu0 %v237
  %460 = vmatprep.subr.mxu0 %v247
  %461 = vmatpush1.msra.mxu0 %v246
  %462 = vmatprep.subr.mxu0 %v256
  %463 = vmatpush1.msra.mxu0 %v255
  %464 = vmatprep.subr.mxu0 %v265
  %465 = vmatpush1.msra.mxu0 %v264
  %466 = vmatprep.subr.mxu0 %v304
  %467 = vmatpush1.msra.mxu0 %v301
  %468 = vmatprep.subr.mxu0 0.0
  %469 = vmatpush1.msra.mxu0 0.0
  %470 = vmatprep.subr.mxu0 0.0
  %471 = vmatpush1.msra.mxu0 0.0
  %472 = vmatprep.subr.mxu0 0.0
  %473 = vmatpush1.msra.mxu0 0.0
  %474 = vmatprep.mubr.f32.mxu0 %v282
  %475 = vmatmul.mubr.f32.gmra.mrb[0].mxu0 %v11
  %v476 = vpop.f32.mrb[0].mxu0
  %v477 = vadd.f32 0.0, %v476
  %v478 = vpop.f32.mrb[0].mxu0
  %v479 = vadd.f32 0.0, %v478
  %480 = vmatprep.mubr.f32.mxu0 %v285
  %481 = vmatmul.mubr.f32.gmra.mrb[0].mxu0 %v13
  %v482 = vpop.f32.mrb[0].mxu0
  %v483 = vadd.f32 0.0, %v482
  %v484 = vpop.f32.mrb[0].mxu0
  %v485 = vadd.f32 0.0, %v484
  %486 = vmatprep.mubr.f32.mxu0 %v288
  %487 = vmatmul.mubr.f32.gmra.mrb[0].mxu0 %v15
  %v488 = vpop.f32.mrb[0].mxu0
  %v489 = vadd.f32 0.0, %v488
  %v490 = vpop.f32.mrb[0].mxu0
  %v491 = vadd.f32 0.0, %v490
  %492 = vmatprep.mubr.f32.mxu0 %v291
  %493 = vmatmul.mubr.f32.gmra.mrb[0].mxu0 %v17
  %v494 = vpop.f32.mrb[0].mxu0
  %v495 = vadd.f32 0.0, %v494
  %v496 = vpop.f32.mrb[0].mxu0
  %v497 = vadd.f32 0.0, %v496
  %498 = vdwg.mxu0
  %499 = vmatprep.subr.mxu0 %v24
  %500 = vmatpush1.msra.mxu0 %v23
  %501 = vmatprep.subr.mxu0 %v33
  %502 = vmatpush1.msra.mxu0 %v32
  %503 = vmatprep.subr.mxu0 %v42
  %504 = vmatpush1.msra.mxu0 %v41
  %505 = vmatprep.subr.mxu0 %v51
  %506 = vmatpush1.msra.mxu0 %v50
  %507 = vmatprep.subr.mxu0 %v60
  %508 = vmatpush1.msra.mxu0 %v59
  %509 = vmatprep.subr.mxu0 %v69
  %510 = vmatpush1.msra.mxu0 %v68
  %511 = vmatprep.subr.mxu0 %v78
  %512 = vmatpush1.msra.mxu0 %v77
  %513 = vmatprep.subr.mxu0 %v87
  %514 = vmatpush1.msra.mxu0 %v86
  %515 = vmatprep.subr.mxu0 %v96
  %516 = vmatpush1.msra.mxu0 %v95
  %517 = vmatprep.subr.mxu0 %v105
  %518 = vmatpush1.msra.mxu0 %v104
  %519 = vmatprep.subr.mxu0 %v114
  %520 = vmatpush1.msra.mxu0 %v113
  %521 = vmatprep.subr.mxu0 %v123
  %522 = vmatpush1.msra.mxu0 %v122
  %523 = vmatprep.subr.mxu0 %v132
  %524 = vmatpush1.msra.mxu0 %v131
  %525 = vmatprep.subr.mxu0 %v141
  %526 = vmatpush1.msra.mxu0 %v140
  %527 = vmatprep.subr.mxu0 %v150
  %528 = vmatpush1.msra.mxu0 %v149
  %529 = vmatprep.subr.mxu0 %v159
  %530 = vmatpush1.msra.mxu0 %v158
  %531 = vmatprep.subr.mxu0 %v168
  %532 = vmatpush1.msra.mxu0 %v167
  %533 = vmatprep.subr.mxu0 %v177
  %534 = vmatpush1.msra.mxu0 %v176
  %535 = vmatprep.subr.mxu0 %v186
  %536 = vmatpush1.msra.mxu0 %v185
  %537 = vmatprep.subr.mxu0 %v195
  %538 = vmatpush1.msra.mxu0 %v194
  %539 = vmatprep.subr.mxu0 %v204
  %540 = vmatpush1.msra.mxu0 %v203
  %541 = vmatprep.subr.mxu0 %v213
  %542 = vmatpush1.msra.mxu0 %v212
  %543 = vmatprep.subr.mxu0 %v222
  %544 = vmatpush1.msra.mxu0 %v221
  %545 = vmatprep.subr.mxu0 %v231
  %546 = vmatpush1.msra.mxu0 %v230
  %547 = vmatprep.subr.mxu0 %v240
  %548 = vmatpush1.msra.mxu0 %v239
  %549 = vmatprep.subr.mxu0 %v249
  %550 = vmatpush1.msra.mxu0 %v248
  %551 = vmatprep.subr.mxu0 %v258
  %552 = vmatpush1.msra.mxu0 %v257
  %553 = vmatprep.subr.mxu0 %v267
  %554 = vmatpush1.msra.mxu0 %v266
  %555 = vmatprep.subr.mxu0 %v310
  %556 = vmatpush1.msra.mxu0 %v307
  %557 = vmatprep.subr.mxu0 0.0
  %558 = vmatpush1.msra.mxu0 0.0
  %559 = vmatprep.subr.mxu0 0.0
  %560 = vmatpush1.msra.mxu0 0.0
  %561 = vmatprep.subr.mxu0 0.0
  %562 = vmatpush1.msra.mxu0 0.0
  %563 = vmatprep.mubr.f32.mxu0 %v282
  %564 = vmatmul.mubr.f32.gmra.mrb[0].mxu0 %v11
  %v565 = vpop.f32.mrb[0].mxu0
  %v566 = vadd.f32 0.0, %v565
  %v567 = vpop.f32.mrb[0].mxu0
  %v568 = vadd.f32 0.0, %v567
  %569 = vmatprep.mubr.f32.mxu0 %v285
  %570 = vmatmul.mubr.f32.gmra.mrb[0].mxu0 %v13
  %v571 = vpop.f32.mrb[0].mxu0
  %v572 = vadd.f32 0.0, %v571
  %v573 = vpop.f32.mrb[0].mxu0
  %v574 = vadd.f32 0.0, %v573
  %575 = vmatprep.mubr.f32.mxu0 %v288
  %576 = vmatmul.mubr.f32.gmra.mrb[0].mxu0 %v15
  %v577 = vpop.f32.mrb[0].mxu0
  %v578 = vadd.f32 0.0, %v577
  %v579 = vpop.f32.mrb[0].mxu0
  %v580 = vadd.f32 0.0, %v579
  %581 = vmatprep.mubr.f32.mxu0 %v291
  %582 = vmatmul.mubr.f32.gmra.mrb[0].mxu0 %v17
  %v583 = vpop.f32.mrb[0].mxu0
  %v584 = vadd.f32 0.0, %v583
  %v585 = vpop.f32.mrb[0].mxu0
  %v586 = vadd.f32 0.0, %v585
  %587 = vdwg.mxu0
  %588 = vmatprep.subr.mxu0 %v26
  %589 = vmatpush1.msra.mxu0 %v25
  %590 = vmatprep.subr.mxu0 %v35
  %591 = vmatpush1.msra.mxu0 %v34
  %592 = vmatprep.subr.mxu0 %v44
  %593 = vmatpush1.msra.mxu0 %v43
  %594 = vmatprep.subr.mxu0 %v53
  %595 = vmatpush1.msra.mxu0 %v52
  %596 = vmatprep.subr.mxu0 %v62
  %597 = vmatpush1.msra.mxu0 %v61
  %598 = vmatprep.subr.mxu0 %v71
  %599 = vmatpush1.msra.mxu0 %v70
  %600 = vmatprep.subr.mxu0 %v80
  %601 = vmatpush1.msra.mxu0 %v79
  %602 = vmatprep.subr.mxu0 %v89
  %603 = vmatpush1.msra.mxu0 %v88
  %604 = vmatprep.subr.mxu0 %v98
  %605 = vmatpush1.msra.mxu0 %v97
  %606 = vmatprep.subr.mxu0 %v107
  %607 = vmatpush1.msra.mxu0 %v106
  %608 = vmatprep.subr.mxu0 %v116
  %609 = vmatpush1.msra.mxu0 %v115
  %610 = vmatprep.subr.mxu0 %v125
  %611 = vmatpush1.msra.mxu0 %v124
  %612 = vmatprep.subr.mxu0 %v134
  %613 = vmatpush1.msra.mxu0 %v133
  %614 = vmatprep.subr.mxu0 %v143
  %615 = vmatpush1.msra.mxu0 %v142
  %616 = vmatprep.subr.mxu0 %v152
  %617 = vmatpush1.msra.mxu0 %v151
  %618 = vmatprep.subr.mxu0 %v161
  %619 = vmatpush1.msra.mxu0 %v160
  %620 = vmatprep.subr.mxu0 %v170
  %621 = vmatpush1.msra.mxu0 %v169
  %622 = vmatprep.subr.mxu0 %v179
  %623 = vmatpush1.msra.mxu0 %v178
  %624 = vmatprep.subr.mxu0 %v188
  %625 = vmatpush1.msra.mxu0 %v187
  %626 = vmatprep.subr.mxu0 %v197
  %627 = vmatpush1.msra.mxu0 %v196
  %628 = vmatprep.subr.mxu0 %v206
  %629 = vmatpush1.msra.mxu0 %v205
  %630 = vmatprep.subr.mxu0 %v215
  %631 = vmatpush1.msra.mxu0 %v214
  %632 = vmatprep.subr.mxu0 %v224
  %633 = vmatpush1.msra.mxu0 %v223
  %634 = vmatprep.subr.mxu0 %v233
  %635 = vmatpush1.msra.mxu0 %v232
  %636 = vmatprep.subr.mxu0 %v242
  %637 = vmatpush1.msra.mxu0 %v241
  %638 = vmatprep.subr.mxu0 %v251
  %639 = vmatpush1.msra.mxu0 %v250
  %640 = vmatprep.subr.mxu0 %v260
  %641 = vmatpush1.msra.mxu0 %v259
  %642 = vmatprep.subr.mxu0 %v269
  %643 = vmatpush1.msra.mxu0 %v268
  %644 = vmatprep.subr.mxu0 %v316
  %645 = vmatpush1.msra.mxu0 %v313
  %646 = vmatprep.subr.mxu0 0.0
  %647 = vmatpush1.msra.mxu0 0.0
  %648 = vmatprep.subr.mxu0 0.0
  %649 = vmatpush1.msra.mxu0 0.0
  %650 = vmatprep.subr.mxu0 0.0
  %651 = vmatpush1.msra.mxu0 0.0
  %652 = vmatprep.mubr.f32.mxu0 %v282
  %653 = vmatmul.mubr.f32.gmra.mrb[0].mxu0 %v11
  %v654 = vpop.f32.mrb[0].mxu0
  %v655 = vadd.f32 0.0, %v654
  %v656 = vpop.f32.mrb[0].mxu0
  %v657 = vadd.f32 0.0, %v656
  %658 = vmatprep.mubr.f32.mxu0 %v285
  %659 = vmatmul.mubr.f32.gmra.mrb[0].mxu0 %v13
  %v660 = vpop.f32.mrb[0].mxu0
  %v661 = vadd.f32 0.0, %v660
  %v662 = vpop.f32.mrb[0].mxu0
  %v663 = vadd.f32 0.0, %v662
  %664 = vmatprep.mubr.f32.mxu0 %v288
  %665 = vmatmul.mubr.f32.gmra.mrb[0].mxu0 %v15
  %v666 = vpop.f32.mrb[0].mxu0
  %v667 = vadd.f32 0.0, %v666
  %v668 = vpop.f32.mrb[0].mxu0
  %v669 = vadd.f32 0.0, %v668
  %670 = vmatprep.mubr.f32.mxu0 %v291
  %671 = vmatmul.mubr.f32.gmra.mrb[0].mxu0 %v17
  %v672 = vpop.f32.mrb[0].mxu0
  %v673 = vadd.f32 0.0, %v672
  %v674 = vpop.f32.mrb[0].mxu0
  %v675 = vadd.f32 0.0, %v674
  %676 = vdwg.mxu0
  %677 = vmatprep.subr.mxu0 0.0
  %678 = vmatpush1.msra.mxu0 %v27
  %679 = vmatprep.subr.mxu0 0.0
  %680 = vmatpush1.msra.mxu0 %v36
  %681 = vmatprep.subr.mxu0 0.0
  %682 = vmatpush1.msra.mxu0 %v45
  %683 = vmatprep.subr.mxu0 0.0
  %684 = vmatpush1.msra.mxu0 %v54
  %685 = vmatprep.subr.mxu0 0.0
  %686 = vmatpush1.msra.mxu0 %v63
  %687 = vmatprep.subr.mxu0 0.0
  %688 = vmatpush1.msra.mxu0 %v72
  %689 = vmatprep.subr.mxu0 0.0
  %690 = vmatpush1.msra.mxu0 %v81
  %691 = vmatprep.subr.mxu0 0.0
  %692 = vmatpush1.msra.mxu0 %v90
  %693 = vmatprep.subr.mxu0 0.0
  %694 = vmatpush1.msra.mxu0 %v99
  %695 = vmatprep.subr.mxu0 0.0
  %696 = vmatpush1.msra.mxu0 %v108
  %697 = vmatprep.subr.mxu0 0.0
  %698 = vmatpush1.msra.mxu0 %v117
  %699 = vmatprep.subr.mxu0 0.0
  %700 = vmatpush1.msra.mxu0 %v126
  %701 = vmatprep.subr.mxu0 0.0
  %702 = vmatpush1.msra.mxu0 %v135
  %703 = vmatprep.subr.mxu0 0.0
  %704 = vmatpush1.msra.mxu0 %v144
  %705 = vmatprep.subr.mxu0 0.0
  %706 = vmatpush1.msra.mxu0 %v153
  %707 = vmatprep.subr.mxu0 0.0
  %708 = vmatpush1.msra.mxu0 %v162
  %709 = vmatprep.subr.mxu0 0.0
  %710 = vmatpush1.msra.mxu0 %v171
  %711 = vmatprep.subr.mxu0 0.0
  %712 = vmatpush1.msra.mxu0 %v180
  %713 = vmatprep.subr.mxu0 0.0
  %714 = vmatpush1.msra.mxu0 %v189
  %715 = vmatprep.subr.mxu0 0.0
  %716 = vmatpush1.msra.mxu0 %v198
  %717 = vmatprep.subr.mxu0 0.0
  %718 = vmatpush1.msra.mxu0 %v207
  %719 = vmatprep.subr.mxu0 0.0
  %720 = vmatpush1.msra.mxu0 %v216
  %721 = vmatprep.subr.mxu0 0.0
  %722 = vmatpush1.msra.mxu0 %v225
  %723 = vmatprep.subr.mxu0 0.0
  %724 = vmatpush1.msra.mxu0 %v234
  %725 = vmatprep.subr.mxu0 0.0
  %726 = vmatpush1.msra.mxu0 %v243
  %727 = vmatprep.subr.mxu0 0.0
  %728 = vmatpush1.msra.mxu0 %v252
  %729 = vmatprep.subr.mxu0 0.0
  %730 = vmatpush1.msra.mxu0 %v261
  %731 = vmatprep.subr.mxu0 0.0
  %732 = vmatpush1.msra.mxu0 %v270
  %733 = vmatprep.subr.mxu0 0.0
  %734 = vmatpush1.msra.mxu0 %v319
  %735 = vmatprep.subr.mxu0 0.0
  %736 = vmatpush1.msra.mxu0 0.0
  %737 = vmatprep.subr.mxu0 0.0
  %738 = vmatpush1.msra.mxu0 0.0
  %739 = vmatprep.subr.mxu0 0.0
  %740 = vmatpush1.msra.mxu0 0.0
  %741 = vmatprep.mubr.f32.mxu0 %v282
  %742 = vmatmul.mubr.f32.gmra.mrb[0].mxu0 %v11
  %v743 = vpop.f32.mrb[0].mxu0
  %v744 = vadd.f32 0.0, %v743
  %v745 = vpop.f32.mrb[0].mxu0
  %746 = vmatprep.mubr.f32.mxu0 %v285
  %747 = vmatmul.mubr.f32.gmra.mrb[0].mxu0 %v13
  %v748 = vpop.f32.mrb[0].mxu0
  %v749 = vadd.f32 0.0, %v748
  %v750 = vpop.f32.mrb[0].mxu0
  %751 = vmatprep.mubr.f32.mxu0 %v288
  %752 = vmatmul.mubr.f32.gmra.mrb[0].mxu0 %v15
  %v753 = vpop.f32.mrb[0].mxu0
  %v754 = vadd.f32 0.0, %v753
  %v755 = vpop.f32.mrb[0].mxu0
  %756 = vmatprep.mubr.f32.mxu0 %v291
  %757 = vmatmul.mubr.f32.gmra.mrb[0].mxu0 %v17
  %v758 = vpop.f32.mrb[0].mxu0
  %v759 = vadd.f32 0.0, %v758
  %v760 = vpop.f32.mrb[0].mxu0
  %761 = vdwg.mxu0
  %vm762 = vcmp.gt.f32.partialorder %v388, 0.0
  %vm763 = vcmp.gt.f32.partialorder %v390, 0.0
  %vm764 = vcmp.gt.f32.partialorder %v477, 0.0
  %vm765 = vcmp.gt.f32.partialorder %v479, 0.0
  %vm766 = vcmp.gt.f32.partialorder %v566, 0.0
  %vm767 = vcmp.gt.f32.partialorder %v568, 0.0
  %vm768 = vcmp.gt.f32.partialorder %v655, 0.0
  %vm769 = vcmp.gt.f32.partialorder %v657, 0.0
  %vm770 = vcmp.gt.f32.partialorder %v744, 0.0
  %vm771 = vcmp.gt.f32.partialorder %v394, 0.0
  %vm772 = vcmp.gt.f32.partialorder %v396, 0.0
  %vm773 = vcmp.gt.f32.partialorder %v483, 0.0
  %vm774 = vcmp.gt.f32.partialorder %v485, 0.0
  %vm775 = vcmp.gt.f32.partialorder %v572, 0.0
  %vm776 = vcmp.gt.f32.partialorder %v574, 0.0
  %vm777 = vcmp.gt.f32.partialorder %v661, 0.0
  %vm778 = vcmp.gt.f32.partialorder %v663, 0.0
  %vm779 = vcmp.gt.f32.partialorder %v749, 0.0
  %vm780 = vcmp.gt.f32.partialorder %v400, 0.0
  %vm781 = vcmp.gt.f32.partialorder %v402, 0.0
  %vm782 = vcmp.gt.f32.partialorder %v489, 0.0
  %vm783 = vcmp.gt.f32.partialorder %v491, 0.0
  %vm784 = vcmp.gt.f32.partialorder %v578, 0.0
  %vm785 = vcmp.gt.f32.partialorder %v580, 0.0
  %vm786 = vcmp.gt.f32.partialorder %v667, 0.0
  %vm787 = vcmp.gt.f32.partialorder %v669, 0.0
  %vm788 = vcmp.gt.f32.partialorder %v754, 0.0
  %vm789 = vcmp.gt.f32.partialorder %v406, 0.0
  %vm790 = vcmp.gt.f32.partialorder %v408, 0.0
  %vm791 = vcmp.gt.f32.partialorder %v495, 0.0
  %vm792 = vcmp.gt.f32.partialorder %v497, 0.0
  %vm793 = vcmp.gt.f32.partialorder %v584, 0.0
  %vm794 = vcmp.gt.f32.partialorder %v586, 0.0
  %vm795 = vcmp.gt.f32.partialorder %v673, 0.0
  %vm796 = vcmp.gt.f32.partialorder %v675, 0.0
  %vm797 = vcmp.gt.f32.partialorder %v759, 0.0
  %v798 = vmul.f32 %v388, 4.4892
  %v799 = vmul.f32 %v390, 4.4892
  %v800 = vmul.f32 %v477, 4.4892
  %v801 = vmul.f32 %v479, 4.4892
  %v802 = vmul.f32 %v566, 4.4892
  %v803 = vmul.f32 %v568, 4.4892
  %v804 = vmul.f32 %v655, 4.4892
  %v805 = vmul.f32 %v657, 4.4892
  %v806 = vmul.f32 %v744, 4.4892
  %v807 = vmul.f32 %v394, 4.4892
  %v808 = vmul.f32 %v396, 4.4892
  %v809 = vmul.f32 %v483, 4.4892
  %v810 = vmul.f32 %v485, 4.4892
  %v811 = vmul.f32 %v572, 4.4892
  %v812 = vmul.f32 %v574, 4.4892
  %v813 = vmul.f32 %v661, 4.4892
  %v814 = vmul.f32 %v663, 4.4892
  %v815 = vmul.f32 %v749, 4.4892
  %v816 = vmul.f32 %v400, 4.4892
  %v817 = vmul.f32 %v402, 4.4892
  %v818 = vmul.f32 %v489, 4.4892
  %v819 = vmul.f32 %v491, 4.4892
  %v820 = vmul.f32 %v578, 4.4892
  %v821 = vmul.f32 %v580, 4.4892
  %v822 = vmul.f32 %v667, 4.4892
  %v823 = vmul.f32 %v669, 4.4892
  %v824 = vmul.f32 %v754, 4.4892
  %v825 = vmul.f32 %v406, 4.4892
  %v826 = vmul.f32 %v408, 4.4892
  %v827 = vmul.f32 %v495, 4.4892
  %v828 = vmul.f32 %v497, 4.4892
  %v829 = vmul.f32 %v584, 4.4892
  %v830 = vmul.f32 %v586, 4.4892
  %v831 = vmul.f32 %v673, 4.4892
  %v832 = vmul.f32 %v675, 4.4892
  %v833 = vmul.f32 %v759, 4.4892
  %v834 = vsel %vm762, %v388, %v798
  %v835 = vsel %vm763, %v390, %v799
  %v836 = vsel %vm764, %v477, %v800
  %v837 = vsel %vm765, %v479, %v801
  %v838 = vsel %vm766, %v566, %v802
  %v839 = vsel %vm767, %v568, %v803
  %v840 = vsel %vm768, %v655, %v804
  %v841 = vsel %vm769, %v657, %v805
  %v842 = vsel %vm770, %v744, %v806
  %v843 = vsel %vm771, %v394, %v807
  %v844 = vsel %vm772, %v396, %v808
  %v845 = vsel %vm773, %v483, %v809
  %v846 = vsel %vm774, %v485, %v810
  %v847 = vsel %vm775, %v572, %v811
  %v848 = vsel %vm776, %v574, %v812
  %v849 = vsel %vm777, %v661, %v813
  %v850 = vsel %vm778, %v663, %v814
  %v851 = vsel %vm779, %v749, %v815
  %v852 = vsel %vm780, %v400, %v816
  %v853 = vsel %vm781, %v402, %v817
  %v854 = vsel %vm782, %v489, %v818
  %v855 = vsel %vm783, %v491, %v819
  %v856 = vsel %vm784, %v578, %v820
  %v857 = vsel %vm785, %v580, %v821
  %v858 = vsel %vm786, %v667, %v822
  %v859 = vsel %vm787, %v669, %v823
  %v860 = vsel %vm788, %v754, %v824
  %v861 = vsel %vm789, %v406, %v825
  %v862 = vsel %vm790, %v408, %v826
  %v863 = vsel %vm791, %v495, %v827
  %v864 = vsel %vm792, %v497, %v828
  %v865 = vsel %vm793, %v584, %v829
  %v866 = vsel %vm794, %v586, %v830
  %v867 = vsel %vm795, %v673, %v831
  %v868 = vsel %vm796, %v675, %v832
  %v869 = vsel %vm797, %v759, %v833
  %870 = vst [vmem:[%s2] sm:$0xff] %v834
  %871 = vst [vmem:[%s2 + $0x8] sm:$0xff] %v835
  %872 = vst [vmem:[%s2 + $0x10] sm:$0xff] %v836
  %873 = vst [vmem:[%s2 + $0x18] sm:$0xff] %v837
  %874 = vst [vmem:[%s2 + $0x20] sm:$0xff] %v838
  %875 = vst [vmem:[%s2 + $0x28] sm:$0xff] %v839
  %876 = vst [vmem:[%s2 + $0x30] sm:$0xff] %v840
  %877 = vst [vmem:[%s2 + $0x38] sm:$0xff] %v841
  %878 = vst [vmem:[%s2 + $0x40] sm:$0xff] %v842
  %879 = vst [vmem:[%s2 + $0x48] sm:$0xff] %v843
  %880 = vst [vmem:[%s2 + $0x50] sm:$0xff] %v844
  %881 = vst [vmem:[%s2 + $0x58] sm:$0xff] %v845
  %882 = vst [vmem:[%s2 + $0x60] sm:$0xff] %v846
  %883 = vst [vmem:[%s2 + $0x68] sm:$0xff] %v847
  %884 = vst [vmem:[%s2 + $0x70] sm:$0xff] %v848
  %885 = vst [vmem:[%s2 + $0x78] sm:$0xff] %v849
  %886 = vst [vmem:[%s2 + $0x80] sm:$0xff] %v850
  %887 = vst [vmem:[%s2 + $0x88] sm:$0xff] %v851
  %888 = vst [vmem:[%s2 + $0x90] sm:$0xff] %v852
  %889 = vst [vmem:[%s2 + $0x98] sm:$0xff] %v853
  %890 = vst [vmem:[%s2 + $0xa0] sm:$0xff] %v854
  %891 = vst [vmem:[%s2 + $0xa8] sm:$0xff] %v855
  %892 = vst [vmem:[%s2 + $0xb0] sm:$0xff] %v856
  %893 = vst [vmem:[%s2 + $0xb8] sm:$0xff] %v857
  %894 = vst [vmem:[%s2 + $0xc0] sm:$0xff] %v858
  %895 = vst [vmem:[%s2 + $0xc8] sm:$0xff] %v859
  %896 = vst [vmem:[%s2 + $0xd0] sm:$0xff] %v860
  %897 = vst [vmem:[%s2 + $0xd8] sm:$0xff] %v861
  %898 = vst [vmem:[%s2 + $0xe0] sm:$0xff] %v862
  %899 = vst [vmem:[%s2 + $0xe8] sm:$0xff] %v863
  %900 = vst [vmem:[%s2 + $0xf0] sm:$0xff] %v864
  %901 = vst [vmem:[%s2 + $0xf8] sm:$0xff] %v865
  %902 = vst [vmem:[%s2 + $0x100] sm:$0xff] %v866
  %903 = vst [vmem:[%s2 + $0x108] sm:$0xff] %v867
  %904 = vst [vmem:[%s2 + $0x110] sm:$0xff] %v868
  %905 = vst [vmem:[%s2 + $0x118] sm:$0xff] %v869
  // Predicated region
  $region10: #{conv_transpose_where.1} parent=0 // pred_check
    _
  $region11: #{conv_transpose_where.1} parent=0 // pred_check_branch
    %907 = sbr.rel (0) target = $region13
  $region12: #{conv_transpose_where.1} parent=0 // pred_region
    _
  $region13: #{conv_transpose_where.1} parent=0 // pred_fallthru
    _
  // Predicated region
  $region14: #{conv_transpose_where.1} parent=0 // pred_check
    _
  $region15: #{conv_transpose_where.1} parent=0 // pred_check_branch
    %909 = sbr.rel (0) target = $region17
  $region16: #{conv_transpose_where.1} parent=0 // pred_region
    _
  $region17: #{conv_transpose_where.1} parent=0 // pred_fallthru
    _

</llo_original>
